<compile_context>
chip_gen: v7x
topology: tpu7x:2x2x1
jax: 0.10.0
libtpu: 0.0.40
codegen_flags: <defaults>
</compile_context>

<pallas_src>
import jax
import jax.numpy as jnp
from jax.experimental import pallas as pl
from jax.experimental.pallas import tpu as pltpu

ROW_TILE = 128   # row tile for MLP rows and scatter node tiles (>= MXU M dim on all chips)
LANE = 128       # lane width; all stored feature dims are padded to a multiple of this


def _round_up(x, m):
    return (x + m - 1) // m * m


def _pad2d(x, rows, cols):
    return jnp.pad(x, ((0, rows - x.shape[0]), (0, cols - x.shape[1])))


# ---------------------------------------------------------------------------
# Pallas kernels
# ---------------------------------------------------------------------------
def _make_mlp3_kernel(n_in, has_res):
    """Lin -> ReLU -> Lin -> ReLU -> Lin (+ optional fused residual).

    The first layer takes `n_in` separate input segments and their w1 chunks, so the caller
    never has to materialize a concatenated input.  MXU operands are bf16, accumulation f32.
    """

    def kernel(*refs):
        xs = refs[0:n_in]
        w1s = refs[n_in:2 * n_in]
        b1, w2, b2, w3, b3 = refs[2 * n_in:2 * n_in + 5]
        res = refs[2 * n_in + 5] if has_res else None
        o_ref = refs[-1]

        h = None
        for x, w in zip(xs, w1s):
            d = jnp.dot(x[...].astype(jnp.bfloat16), w[...],
                        preferred_element_type=jnp.float32)
            h = d if h is None else h + d
        h = jnp.maximum(h + b1[...], 0.0)
        h = jnp.dot(h.astype(jnp.bfloat16), w2[...],
                    preferred_element_type=jnp.float32) + b2[...]
        h = jnp.maximum(h, 0.0)
        o = jnp.dot(h.astype(jnp.bfloat16), w3[...],
                    preferred_element_type=jnp.float32) + b3[...]
        if has_res:
            o = o + res[...]
        o_ref[...] = o.astype(o_ref.dtype)

    return kernel


def _scatter_add_kernel(recv_ref, msg_ref, out_ref):
    """out[n,:] = sum_{e: recv[e]==n} msg[e,:] via tiled one-hot matmul.

    Grid = (node_tile, edge_tile); edge axis is last ('arbitrary') and the output block is the
    resident accumulator, so only a (TN,TE) one-hot and a (TE,H) message tile live in VMEM.
    Padded edges carry recv == -1 and never match any node row.
    """
    i = pl.program_id(0)            # node tile (parallel)
    j = pl.program_id(1)            # edge tile (reduction, innermost)

    @pl.when(j == 0)
    def _():
        out_ref[...] = jnp.zeros_like(out_ref)

    tn = out_ref.shape[0]
    te = msg_ref.shape[0]
    row_ids = jax.lax.broadcasted_iota(jnp.int32, (tn, te), 0) + i * tn
    onehot = (row_ids == recv_ref[...]).astype(jnp.bfloat16)        # recv (1, te) broadcasts
    out_ref[...] += jnp.dot(onehot, msg_ref[...].astype(jnp.bfloat16),
                            preferred_element_type=jnp.float32)


# ---------------------------------------------------------------------------
# Pallas wrappers
# ---------------------------------------------------------------------------
def mlp3(xs, prep, residual=None):
    """Apply a prepped 3-layer MLP to row-padded, lane-padded inputs.

    xs: list of f32 (M, Dk) arrays (same M, M % ROW_TILE == 0, Dk % 128 == 0).
    The first layer is computed as sum_k xs[k] @ w1s[k]  (== concat(xs) @ w1, without the
    concat).  `residual` (same shape as output) is added inside the kernel.
    """
    n_in = len(xs)
    has_res = residual is not None
    m = xs[0].shape[0]
    tm = ROW_TILE
    h = prep["w1s"][0].shape[1]
    dout = prep["w3"].shape[1]

    args = list(xs) + list(prep["w1s"]) + [prep["b1"], prep["w2"], prep["b2"],
                                           prep["w3"], prep["b3"]]
    in_specs = [pl.BlockSpec((tm, x.shape[1]), lambda i: (i, 0)) for x in xs]
    in_specs += [pl.BlockSpec(w.shape, lambda i: (0, 0)) for w in prep["w1s"]]
    in_specs += [pl.BlockSpec(prep[k].shape, lambda i: (0, 0))
                 for k in ("b1", "w2", "b2", "w3", "b3")]
    if has_res:
        args.append(residual)
        in_specs.append(pl.BlockSpec((tm, dout), lambda i: (i, 0)))

    din = sum(x.shape[1] for x in xs)
    flops = 2 * m * (din * h + h * h + h * dout)
    bytes_accessed = (4 * m * (din + 2 * dout) + (4 * m * dout if has_res else 0)
                      + 2 * (din * h + h * h + h * dout) + 4 * (2 * h + dout))

    return pl.pallas_call(
        _make_mlp3_kernel(n_in, has_res),
        out_shape=jax.ShapeDtypeStruct((m, dout), jnp.float32),
        grid_spec=pltpu.PrefetchScalarGridSpec(
            num_scalar_prefetch=0,
            grid=(m // tm,),
            in_specs=in_specs,
            out_specs=pl.BlockSpec((tm, dout), lambda i: (i, 0)),
        ),
        compiler_params=pltpu.CompilerParams(
            dimension_semantics=("parallel",),
            vmem_limit_bytes=32 * 1024 * 1024,
        ),
        cost_estimate=pl.CostEstimate(flops=flops, transcendentals=0,
                                      bytes_accessed=bytes_accessed),
    )(*args)


def scatter_add(recv2d, messages, num_nodes_pad):
    """Segment-sum messages into num_nodes_pad rows. recv2d: (1, E_pad) int32, -1 = masked."""
    e_pad, h = messages.shape
    tn = ROW_TILE
    te = 512 if e_pad % 512 == 0 else (256 if e_pad % 256 == 0 else 128)
    n_tiles, e_tiles = num_nodes_pad // tn, e_pad // te

    # TODO(synk): a CSR (receiver-sorted, scalar-prefetched offsets) scatter would be O(E*h);
    # the tiled one-hot matmul here is O(N*E*h) but keeps VMEM residency bounded per tile.
    flops = 2 * num_nodes_pad * e_pad * h
    bytes_accessed = 4 * e_pad * h * n_tiles + 4 * e_pad * n_tiles + 4 * num_nodes_pad * h

    return pl.pallas_call(
        _scatter_add_kernel,
        out_shape=jax.ShapeDtypeStruct((num_nodes_pad, h), jnp.float32),
        grid_spec=pltpu.PrefetchScalarGridSpec(
            num_scalar_prefetch=0,
            grid=(n_tiles, e_tiles),
            in_specs=[
                pl.BlockSpec((1, te), lambda i, j: (0, j)),
                pl.BlockSpec((te, h), lambda i, j: (j, 0)),
            ],
            out_specs=pl.BlockSpec((tn, h), lambda i, j: (i, 0)),
        ),
        compiler_params=pltpu.CompilerParams(
            dimension_semantics=("parallel", "arbitrary"),
            vmem_limit_bytes=32 * 1024 * 1024,
        ),
        cost_estimate=pl.CostEstimate(flops=flops, transcendentals=0,
                                      bytes_accessed=bytes_accessed),
    )(recv2d, messages)


# ---------------------------------------------------------------------------
# Parameter init (deterministic, mimics torch.nn.Linear default init) + kernel-side prep
# ---------------------------------------------------------------------------
def init_linear(key, din, dout):
    k1, k2 = jax.random.split(key)
    bound = 1.0 / jnp.sqrt(jnp.float32(din))
    w = jax.random.uniform(k1, (din, dout), jnp.float32, -bound, bound)
    b = jax.random.uniform(k2, (1, dout), jnp.float32, -bound, bound)
    return w, b


def init_mlp3(key, din, h, dout):
    k1, k2, k3 = jax.random.split(key, 3)
    w1, b1 = init_linear(k1, din, h)
    w2, b2 = init_linear(k2, h, h)
    w3, b3 = init_linear(k3, h, dout)
    return (w1, b1, w2, b2, w3, b3)


def prep_mlp3(p, in_dims, dout):
    """Zero-pad weights to lane-dense shapes, split w1 per input segment, pre-cast to bf16."""
    w1, b1, w2, b2, w3, b3 = p
    h = w1.shape[1]
    hp = _round_up(h, LANE)
    dp = _round_up(dout, LANE)

    def pad(a, rows, cols):
        return jnp.zeros((rows, cols), jnp.float32).at[:a.shape[0], :a.shape[1]].set(a)

    w1s, off = [], 0
    for d in in_dims:
        w1s.append(pad(w1[off:off + d, :], _round_up(d, LANE), hp).astype(jnp.bfloat16))
        off += d
    assert off == w1.shape[0]
    return {
        "w1s": tuple(w1s),
        "b1": pad(b1, 1, hp),
        "w2": pad(w2, hp, hp).astype(jnp.bfloat16),
        "b2": pad(b2, 1, hp),
        "w3": pad(w3, hp, dp).astype(jnp.bfloat16),
        "b3": pad(b3, 1, dp),
    }


def prep_params(params, node_dim, edge_dim, h_dim, out_dim):
    return {
        "enc_node": prep_mlp3(params["enc_node"], [node_dim], h_dim),
        "enc_edge": prep_mlp3(params["enc_edge"], [edge_dim], h_dim),
        "dec": prep_mlp3(params["dec"], [h_dim], out_dim),
        "blocks": [
            {
                "edge_mlps": [prep_mlp3(ep, [h_dim, h_dim, h_dim], h_dim)
                              for ep in blk["edge_mlps"]],
                "node_mlp": prep_mlp3(blk["node_mlp"], [h_dim, h_dim], h_dim),
            }
            for blk in params["blocks"]
        ],
        "out_dim": out_dim,
    }


# ---------------------------------------------------------------------------
# MeshGraphNet forward (Pallas-backed)
# ---------------------------------------------------------------------------
def mesh_graph_net_forward(prepped, node_features, edge_sets):
    n, node_dim = node_features.shape
    n_pad = _round_up(n, ROW_TILE)
    x_nodes = _pad2d(node_features.astype(jnp.float32), n_pad, _round_up(node_dim, LANE))

    packed = []
    for es in edge_sets:
        feats = es["features"].astype(jnp.float32)
        e, edge_dim = feats.shape
        e_pad = _round_up(e, ROW_TILE)
        packed.append({
            "features": _pad2d(feats, e_pad, _round_up(edge_dim, LANE)),
            "senders": jnp.pad(es["senders"].astype(jnp.int32), (0, e_pad - e)),
            "recv_gather": jnp.pad(es["receivers"].astype(jnp.int32), (0, e_pad - e)),
            # -1 on padded edges -> never matches a node row in the scatter one-hot.
            "recv_scatter": jnp.pad(es["receivers"].astype(jnp.int32), (0, e_pad - e),
                                    constant_values=-1).reshape(1, e_pad),
        })

    # encoder
    nodes = mlp3([x_nodes], prepped["enc_node"])                               # (n_pad, H)
    edge_feats = [mlp3([p["features"]], prepped["enc_edge"]) for p in packed]  # (e_pad, H)

    # message-passing blocks
    for blk in prepped["blocks"]:
        new_edge_feats = []
        agg = None
        for p, ef, ep in zip(packed, edge_feats, blk["edge_mlps"]):
            # TODO(synk): fuse these row gathers into the edge-MLP kernel via manual DMA /
            # scalar-prefetched indices; kept as an XLA gather for now.
            s_feat = jnp.take(nodes, p["senders"], axis=0)
            r_feat = jnp.take(nodes, p["recv_gather"], axis=0)
            upd = mlp3([ef, s_feat, r_feat], ep, residual=ef)   # fused concat + residual
            new_edge_feats.append(upd)
            part = scatter_add(p["recv_scatter"], upd, n_pad)
            agg = part if agg is None else agg + part
        nodes = mlp3([nodes, agg], blk["node_mlp"], residual=nodes)  # fused concat + residual
        edge_feats = new_edge_feats

    # decoder (lane-padded output, slice back to logical shape)
    out = mlp3([nodes], prepped["dec"])
    return out[:n, :prepped["out_dim"]]


# ---------------------------------------------------------------------------
# JAX reference with matched MXU operand precision (bf16 operands, f32 accumulation)
# ---------------------------------------------------------------------------
def _bdot(a, b):
    return jnp.dot(a.astype(jnp.bfloat16), b.astype(jnp.bfloat16),
                   preferred_element_type=jnp.float32)


def _ref_mlp3(x, p):
    w1, b1, w2, b2, w3, b3 = p
    h = jnp.maximum(_bdot(x, w1) + b1, 0.0)
    h = jnp.maximum(_bdot(h, w2) + b2, 0.0)
    return _bdot(h, w3) + b3


def ref_forward(params, node_features, edge_sets):
    nodes = _ref_mlp3(node_features, params["enc_node"])
    efs = [_ref_mlp3(es["features"], params["enc_edge"]) for es in edge_sets]
    n = nodes.shape[0]
    for blk in params["blocks"]:
        new_efs = []
        agg = jnp.zeros((n, nodes.shape[1]), jnp.float32)
        for es, ef, ep in zip(edge_sets, efs, blk["edge_mlps"]):
            s = jnp.take(nodes, es["senders"], axis=0)
            r = jnp.take(nodes, es["receivers"], axis=0)
            upd = _ref_mlp3(jnp.concatenate([ef, s, r], 1), ep) + ef
            new_efs.append(upd)
            msg = upd.astype(jnp.bfloat16).astype(jnp.float32)   # scatter reads bf16 messages
            agg = agg + jax.ops.segment_sum(msg, es["receivers"], num_segments=n)
        nodes = _ref_mlp3(jnp.concatenate([nodes, agg], 1), blk["node_mlp"]) + nodes
        efs = new_efs
    return _ref_mlp3(nodes, params["dec"])


if __name__ == "__main__":
    node_dim, edge_dim, h_dim, out_dim, n_blocks = 8, 4, 32, 3, 2
    N, E = 64, 128

    key = jax.random.PRNGKey(0)
    keys = jax.random.split(key, 6)
    node_features = jax.random.normal(keys[0], (N, node_dim), jnp.float32)
    edge_features = jax.random.normal(keys[1], (E, edge_dim), jnp.float32)
    senders = jax.random.randint(keys[2], (E,), 0, N)
    receivers = jax.random.randint(keys[3], (E,), 0, N)

    pkeys = jax.random.split(keys[4], 3 + n_blocks)
    params = {
        "enc_node": init_mlp3(pkeys[0], node_dim, h_dim, h_dim),
        "enc_edge": init_mlp3(pkeys[1], edge_dim, h_dim, h_dim),
        "dec": init_mlp3(pkeys[2], h_dim, h_dim, out_dim),
        "blocks": [],
    }
    for b in range(n_blocks):
        bk = jax.random.split(pkeys[3 + b], 2)
        params["blocks"].append({
            "edge_mlps": [init_mlp3(bk[0], 3 * h_dim, h_dim, h_dim)],
            "node_mlp": init_mlp3(bk[1], 2 * h_dim, h_dim, h_dim),
        })

    edge_sets = [{"features": edge_features, "senders": senders, "receivers": receivers}]

    prepped = prep_params(params, node_dim, edge_dim, h_dim, out_dim)
    out = jax.block_until_ready(mesh_graph_net_forward(prepped, node_features, edge_sets))
    assert out.shape == (N, out_dim)

    # Reference uses the same bf16-operand / f32-accumulate matmul semantics as the kernels
    # (per review, f32-operand tolerances no longer apply once MXU operands are bf16).
    ref = jax.block_until_ready(ref_forward(params, node_features, edge_sets))
    assert jnp.allclose(out, ref, rtol=2e-3, atol=2e-3), \
        "Pallas output mismatch vs bf16-operand JAX reference"

    print("KERNEL_OK")
</pallas_src>

<mosaic_0001>
module attributes {stable_mosaic.version = 11 : i64} {
  func.func @kernel(%arg0: i32, %arg1: memref<128x128xf32, #tpu.memory_space<vmem>>, %arg2: memref<128x128xbf16, #tpu.memory_space<vmem>>, %arg3: memref<1x128xf32, #tpu.memory_space<vmem>>, %arg4: memref<128x128xbf16, #tpu.memory_space<vmem>>, %arg5: memref<1x128xf32, #tpu.memory_space<vmem>>, %arg6: memref<128x128xbf16, #tpu.memory_space<vmem>>, %arg7: memref<1x128xf32, #tpu.memory_space<vmem>>, %arg8: memref<128x128xf32, #tpu.memory_space<vmem>>) attributes {dimension_semantics = [#tpu.dimension_semantics<parallel>], iteration_bounds = array<i64: 1>, scalar_prefetch = 0 : i64, scratch_operands = 0 : i64, tpu.core_type = #tpu.core_type<tc>, window_params = [{transform_indices = @transform_0, window_bounds = array<i64: 128, 128>}, {pipeline_mode = #tpu.pipeline_mode<synchronous>, transform_indices = @transform_1, window_bounds = array<i64: 128, 128>}, {pipeline_mode = #tpu.pipeline_mode<synchronous>, transform_indices = @transform_2, window_bounds = array<i64: 1, 128>}, {pipeline_mode = #tpu.pipeline_mode<synchronous>, transform_indices = @transform_3, window_bounds = array<i64: 128, 128>}, {pipeline_mode = #tpu.pipeline_mode<synchronous>, transform_indices = @transform_4, window_bounds = array<i64: 1, 128>}, {pipeline_mode = #tpu.pipeline_mode<synchronous>, transform_indices = @transform_5, window_bounds = array<i64: 128, 128>}, {pipeline_mode = #tpu.pipeline_mode<synchronous>, transform_indices = @transform_6, window_bounds = array<i64: 1, 128>}, {transform_indices = @transform_7, window_bounds = array<i64: 128, 128>}]} {
    %c0 = arith.constant 0 : index
    %c0_0 = arith.constant 0 : index
    %0 = vector.load %arg1[%c0, %c0_0] : memref<128x128xf32, #tpu.memory_space<vmem>>, vector<128x128xf32>
    %1 = arith.truncf %0 : vector<128x128xf32> to vector<128x128xbf16>
    %c0_1 = arith.constant 0 : index
    %c0_2 = arith.constant 0 : index
    %2 = vector.load %arg2[%c0_1, %c0_2] : memref<128x128xbf16, #tpu.memory_space<vmem>>, vector<128x128xbf16>
    %cst = arith.constant dense<0.000000e+00> : vector<128x128xf32>
    %3 = tpu.matmul %1, %2, %cst {dimension_numbers = #tpu.dot_dimension_numbers<[1], [0], [0], [1], [0, 0, 1, 1], [], []>} : vector<128x128xbf16>, vector<128x128xbf16>, vector<128x128xf32> -> vector<128x128xf32>
    %c0_3 = arith.constant 0 : index
    %c0_4 = arith.constant 0 : index
    %4 = vector.load %arg3[%c0_3, %c0_4] : memref<1x128xf32, #tpu.memory_space<vmem>>, vector<1x128xf32>
    %5 = vector.broadcast %4 : vector<1x128xf32> to vector<128x128xf32>
    %6 = arith.addf %3, %5 : vector<128x128xf32>
    %cst_5 = arith.constant 0.000000e+00 : f32
    %7 = vector.broadcast %cst_5 : f32 to vector<128x128xf32>
    %8 = arith.maximumf %6, %7 : vector<128x128xf32>
    %9 = arith.truncf %8 : vector<128x128xf32> to vector<128x128xbf16>
    %c0_6 = arith.constant 0 : index
    %c0_7 = arith.constant 0 : index
    %10 = vector.load %arg4[%c0_6, %c0_7] : memref<128x128xbf16, #tpu.memory_space<vmem>>, vector<128x128xbf16>
    %cst_8 = arith.constant dense<0.000000e+00> : vector<128x128xf32>
    %11 = tpu.matmul %9, %10, %cst_8 {dimension_numbers = #tpu.dot_dimension_numbers<[1], [0], [0], [1], [0, 0, 1, 1], [], []>} : vector<128x128xbf16>, vector<128x128xbf16>, vector<128x128xf32> -> vector<128x128xf32>
    %c0_9 = arith.constant 0 : index
    %c0_10 = arith.constant 0 : index
    %12 = vector.load %arg5[%c0_9, %c0_10] : memref<1x128xf32, #tpu.memory_space<vmem>>, vector<1x128xf32>
    %13 = vector.broadcast %12 : vector<1x128xf32> to vector<128x128xf32>
    %14 = arith.addf %11, %13 : vector<128x128xf32>
    %cst_11 = arith.constant 0.000000e+00 : f32
    %15 = vector.broadcast %cst_11 : f32 to vector<128x128xf32>
    %16 = arith.maximumf %14, %15 : vector<128x128xf32>
    %17 = arith.truncf %16 : vector<128x128xf32> to vector<128x128xbf16>
    %c0_12 = arith.constant 0 : index
    %c0_13 = arith.constant 0 : index
    %18 = vector.load %arg6[%c0_12, %c0_13] : memref<128x128xbf16, #tpu.memory_space<vmem>>, vector<128x128xbf16>
    %cst_14 = arith.constant dense<0.000000e+00> : vector<128x128xf32>
    %19 = tpu.matmul %17, %18, %cst_14 {dimension_numbers = #tpu.dot_dimension_numbers<[1], [0], [0], [1], [0, 0, 1, 1], [], []>} : vector<128x128xbf16>, vector<128x128xbf16>, vector<128x128xf32> -> vector<128x128xf32>
    %c0_15 = arith.constant 0 : index
    %c0_16 = arith.constant 0 : index
    %20 = vector.load %arg7[%c0_15, %c0_16] : memref<1x128xf32, #tpu.memory_space<vmem>>, vector<1x128xf32>
    %21 = vector.broadcast %20 : vector<1x128xf32> to vector<128x128xf32>
    %22 = arith.addf %19, %21 : vector<128x128xf32>
    %c0_17 = arith.constant 0 : index
    %c0_18 = arith.constant 0 : index
    %23 = vector.load %arg8[%c0_17, %c0_18] : memref<128x128xf32, #tpu.memory_space<vmem>>, vector<128x128xf32>
    tpu.vector_store %arg8[%c0_17, %c0_18], %22 {strides = array<i32>} : memref<128x128xf32, #tpu.memory_space<vmem>>, vector<128x128xf32>,
    return
  }
  func.func @transform_0(%arg0: i32) -> (i32, i32) {
    %c0_i32 = arith.constant 0 : i32
    %c0_i32_0 = arith.constant 0 : i32
    return %arg0, %c0_i32 : i32, i32
  }
  func.func @transform_1(%arg0: i32) -> (i32, i32) {
    %c0_i32 = arith.constant 0 : i32
    %c0_i32_0 = arith.constant 0 : i32
    %c0_i32_1 = arith.constant 0 : i32
    return %c0_i32, %c0_i32_0 : i32, i32
  }
  func.func @transform_2(%arg0: i32) -> (i32, i32) {
    %c0_i32 = arith.constant 0 : i32
    %c0_i32_0 = arith.constant 0 : i32
    %c0_i32_1 = arith.constant 0 : i32
    return %c0_i32, %c0_i32_0 : i32, i32
  }
  func.func @transform_3(%arg0: i32) -> (i32, i32) {
    %c0_i32 = arith.constant 0 : i32
    %c0_i32_0 = arith.constant 0 : i32
    %c0_i32_1 = arith.constant 0 : i32
    return %c0_i32, %c0_i32_0 : i32, i32
  }
  func.func @transform_4(%arg0: i32) -> (i32, i32) {
    %c0_i32 = arith.constant 0 : i32
    %c0_i32_0 = arith.constant 0 : i32
    %c0_i32_1 = arith.constant 0 : i32
    return %c0_i32, %c0_i32_0 : i32, i32
  }
  func.func @transform_5(%arg0: i32) -> (i32, i32) {
    %c0_i32 = arith.constant 0 : i32
    %c0_i32_0 = arith.constant 0 : i32
    %c0_i32_1 = arith.constant 0 : i32
    return %c0_i32, %c0_i32_0 : i32, i32
  }
  func.func @transform_6(%arg0: i32) -> (i32, i32) {
    %c0_i32 = arith.constant 0 : i32
    %c0_i32_0 = arith.constant 0 : i32
    %c0_i32_1 = arith.constant 0 : i32
    return %c0_i32, %c0_i32_0 : i32, i32
  }
  func.func @transform_7(%arg0: i32) -> (i32, i32) {
    %c0_i32 = arith.constant 0 : i32
    %c0_i32_0 = arith.constant 0 : i32
    return %arg0, %c0_i32 : i32, i32
  }
}

</mosaic_0001>

<llo_original>
// kernel: tpu_custom_call.1
$region0: #{tpu_custom_call.1}
  #allocation0 [shape = 'u32[]', space=smem, size = 0x4, offset = 0x4, fixed_abs, tag = 'smem constant byte address 0x4 - core index']
  #allocation1 [shape = 'u32[144,128]{1,0:T(1,128)}', space=vmem, size = 0x12000, scoped, tag = 'internal scratch']
  %s0 = inlined_call_operand.hbm [shape: f32[128,128], index: 0, kind: input, shape index: {}]
  %s1 = inlined_call_operand.hbm [shape: bf16[128,128], index: 1, kind: input, shape index: {}]
  %s2 = inlined_call_operand.vmem [shape: f32[1,128], index: 2, kind: input, shape index: {}]
  %s3 = inlined_call_operand.hbm [shape: bf16[128,128], index: 3, kind: input, shape index: {}]
  %s4 = inlined_call_operand.vmem [shape: f32[1,128], index: 4, kind: input, shape index: {}]
  %s5 = inlined_call_operand.hbm [shape: bf16[128,128], index: 5, kind: input, shape index: {}]
  %s6 = inlined_call_operand.vmem [shape: f32[1,128], index: 6, kind: input, shape index: {}]
  %s7 = inlined_call_operand.hbm [shape: f32[128,128], index: 7, kind: output, shape index: {}]
  %s8 = sld [smem:[#allocation0]]
  $region54: #{tpu_custom_call.1} parent=0
    _
  %s10 = ssub.s32 1, %s8
  %s11 = scalar_select 0, %s10, %s8
  $region1: #{tpu_custom_call.1} parent=0
    #allocation2 [shape = 'u8[65536]{0}', space=vmem, size = 0x10000, scoped, tag = 'input window, operand 0, single buffered']
    #allocation3 [shape = 's32[1]{0}', space=sflag, size = 0x4, scoped, tag = 'scoped memory for tpu_custom_call.1']
    #allocation4 [shape = 's32[1]{0}', space=sflag, size = 0x4, scoped, tag = 'scoped memory for tpu_custom_call.1']
    #allocation5 [shape = 'u8[32768]{0}', space=vmem, size = 0x8000, scoped, tag = 'input window, operand 1, single buffered']
    #allocation6 [shape = 's32[1]{0}', space=sflag, size = 0x4, scoped, tag = 'scoped memory for tpu_custom_call.1']
    #allocation7 [shape = 'u8[32768]{0}', space=vmem, size = 0x8000, scoped, tag = 'input window, operand 3, single buffered']
    #allocation8 [shape = 'u8[32768]{0}', space=vmem, size = 0x8000, scoped, tag = 'input window, operand 5, single buffered']
    #allocation9 [shape = 's32[1]{0}', space=sflag, size = 0x4, scoped, tag = 'scoped memory for tpu_custom_call.1']
    #allocation10 [shape = 'u8[65536]{0}', space=vmem, size = 0x10000, scoped, tag = 'output window, operand 0, single buffered']
    %12 = vsyncpa [#allocation3], 0
    %13 = vsyncpa [#allocation6], 0
    %14 = vsyncpa [#allocation9], 0
    %15 = vsyncpa [#allocation4], 0
    // Predicated region
    $region2: #{tpu_custom_call.1} parent=1 // pred_check
      _
    $region3: #{tpu_custom_call.1} parent=1 // pred_check_branch
      %17 = sbr.rel (0) target = $region5
    $region4: #{tpu_custom_call.1} parent=1 // pred_region
      %s19 = ssub.s32 2048, 2048
      %20 = vsyncadd [#allocation3], %s19
      %s21 = sshll.u32 [#allocation2], 4
      %s22 = int_to_ptr.vmem [resolvable:$true] %s21
      %27 = dma.hbm_to_vmem [thread:$0]  %s0, 2048, %s22, [#allocation3], 128, 128, 8
    $region5: #{tpu_custom_call.1} parent=1 // pred_fallthru
      _
    // Predicated region
    $region6: #{tpu_custom_call.1} parent=1 // pred_check
      _
    $region7: #{tpu_custom_call.1} parent=1 // pred_check_branch
      %29 = sbr.rel (0) target = $region9
    $region8: #{tpu_custom_call.1} parent=1 // pred_region
      %s31 = ssub.s32 1024, 1024
      %32 = vsyncadd [#allocation6], %s31
      %s33 = sshll.u32 [#allocation5], 4
      %s34 = int_to_ptr.vmem [resolvable:$true] %s33
      %39 = dma.hbm_to_vmem [thread:$0]  %s1, 1024, %s34, [#allocation6], 64, 64, 4
    $region9: #{tpu_custom_call.1} parent=1 // pred_fallthru
      _
    // Predicated region
    $region10: #{tpu_custom_call.1} parent=1 // pred_check
      _
    $region11: #{tpu_custom_call.1} parent=1 // pred_check_branch
      %41 = sbr.rel (0) target = $region13
    $region12: #{tpu_custom_call.1} parent=1 // pred_region
      _
    $region13: #{tpu_custom_call.1} parent=1 // pred_fallthru
      _
    // Predicated region
    $region14: #{tpu_custom_call.1} parent=1 // pred_check
      _
    $region15: #{tpu_custom_call.1} parent=1 // pred_check_branch
      %43 = sbr.rel (0) target = $region17
    $region16: #{tpu_custom_call.1} parent=1 // pred_region
      %s45 = ssub.s32 1024, 1024
      %46 = vsyncadd [#allocation6], %s45
      %s47 = sshll.u32 [#allocation7], 4
      %s48 = int_to_ptr.vmem [resolvable:$true] %s47
      %53 = dma.hbm_to_vmem [thread:$0]  %s3, 1024, %s48, [#allocation6], 64, 64, 4
    $region17: #{tpu_custom_call.1} parent=1 // pred_fallthru
      _
    // Predicated region
    $region18: #{tpu_custom_call.1} parent=1 // pred_check
      _
    $region19: #{tpu_custom_call.1} parent=1 // pred_check_branch
      %55 = sbr.rel (0) target = $region21
    $region20: #{tpu_custom_call.1} parent=1 // pred_region
      _
    $region21: #{tpu_custom_call.1} parent=1 // pred_fallthru
      _
    // Predicated region
    $region22: #{tpu_custom_call.1} parent=1 // pred_check
      _
    $region23: #{tpu_custom_call.1} parent=1 // pred_check_branch
      %57 = sbr.rel (0) target = $region25
    $region24: #{tpu_custom_call.1} parent=1 // pred_region
      %s59 = ssub.s32 1024, 1024
      %60 = vsyncadd [#allocation9], %s59
      %s61 = sshll.u32 [#allocation8], 4
      %s62 = int_to_ptr.vmem [resolvable:$true] %s61
      %67 = dma.hbm_to_vmem [thread:$0]  %s5, 1024, %s62, [#allocation9], 64, 64, 4
    $region25: #{tpu_custom_call.1} parent=1 // pred_fallthru
      _
    // Predicated region
    $region26: #{tpu_custom_call.1} parent=1 // pred_check
      _
    $region27: #{tpu_custom_call.1} parent=1 // pred_check_branch
      %69 = sbr.rel (0) target = $region29
    $region28: #{tpu_custom_call.1} parent=1 // pred_region
      _
    $region29: #{tpu_custom_call.1} parent=1 // pred_fallthru
      _
    // Predicated region
    $region30: #{tpu_custom_call.1} parent=1 // pred_check
      _
    $region31: #{tpu_custom_call.1} parent=1 // pred_check_branch
      %71 = sbr.rel (0) target = $region33
    $region32: #{tpu_custom_call.1} parent=1 // pred_region
      %72 = dma.done [#allocation3], 2048
    $region33: #{tpu_custom_call.1} parent=1 // pred_fallthru
      _
    // Predicated region
    $region34: #{tpu_custom_call.1} parent=1 // pred_check
      _
    $region35: #{tpu_custom_call.1} parent=1 // pred_check_branch
      %74 = sbr.rel (0) target = $region37
    $region36: #{tpu_custom_call.1} parent=1 // pred_region
      %75 = dma.done [#allocation6], 1024
    $region37: #{tpu_custom_call.1} parent=1 // pred_fallthru
      _
    // Predicated region
    $region38: #{tpu_custom_call.1} parent=1 // pred_check
      _
    $region39: #{tpu_custom_call.1} parent=1 // pred_check_branch
      %77 = sbr.rel (0) target = $region41
    $region40: #{tpu_custom_call.1} parent=1 // pred_region
      %78 = dma.done [#allocation6], 1024
    $region41: #{tpu_custom_call.1} parent=1 // pred_fallthru
      _
    // Predicated region
    $region42: #{tpu_custom_call.1} parent=1 // pred_check
      _
    $region43: #{tpu_custom_call.1} parent=1 // pred_check_branch
      %80 = sbr.rel (0) target = $region45
    $region44: #{tpu_custom_call.1} parent=1 // pred_region
      %81 = dma.done [#allocation9], 1024
    $region45: #{tpu_custom_call.1} parent=1 // pred_fallthru
      _
    %v83 = vld [vmem:[#allocation2] sm:$0xff]
    %v84 = vld [vmem:[#allocation2 + $0x8] sm:$0xff]
    %v85 = vld [vmem:[#allocation2 + $0x10] sm:$0xff]
    %v86 = vld [vmem:[#allocation2 + $0x18] sm:$0xff]
    %v87 = vld [vmem:[#allocation2 + $0x20] sm:$0xff]
    %v88 = vld [vmem:[#allocation2 + $0x28] sm:$0xff]
    %v89 = vld [vmem:[#allocation2 + $0x30] sm:$0xff]
    %v90 = vld [vmem:[#allocation2 + $0x38] sm:$0xff]
    %v91 = vld [vmem:[#allocation2 + $0x40] sm:$0xff]
    %v92 = vld [vmem:[#allocation2 + $0x48] sm:$0xff]
    %v93 = vld [vmem:[#allocation2 + $0x50] sm:$0xff]
    %v94 = vld [vmem:[#allocation2 + $0x58] sm:$0xff]
    %v95 = vld [vmem:[#allocation2 + $0x60] sm:$0xff]
    %v96 = vld [vmem:[#allocation2 + $0x68] sm:$0xff]
    %v97 = vld [vmem:[#allocation2 + $0x70] sm:$0xff]
    %v98 = vld [vmem:[#allocation2 + $0x78] sm:$0xff]
    %v99 = vpack.c.bf16 %v84, %v83
    %v100 = vpack.c.bf16 %v86, %v85
    %v101 = vpack.c.bf16 %v88, %v87
    %v102 = vpack.c.bf16 %v90, %v89
    %v103 = vpack.c.bf16 %v92, %v91
    %v104 = vpack.c.bf16 %v94, %v93
    %v105 = vpack.c.bf16 %v96, %v95
    %v106 = vpack.c.bf16 %v98, %v97
    %v107 = vld [vmem:[#allocation5] sm:$0xf]
    %v108 = vld [vmem:[#allocation5 + $0x4] sm:$0xf]
    %v109 = vld [vmem:[#allocation5 + $0x8] sm:$0xf]
    %v110 = vld [vmem:[#allocation5 + $0xc] sm:$0xf]
    %v111 = vld [vmem:[#allocation5 + $0x10] sm:$0xf]
    %v112 = vld [vmem:[#allocation5 + $0x14] sm:$0xf]
    %v113 = vld [vmem:[#allocation5 + $0x18] sm:$0xf]
    %v114 = vld [vmem:[#allocation5 + $0x1c] sm:$0xf]
    %v115 = vld [vmem:[#allocation5 + $0x20] sm:$0xf]
    %v116 = vld [vmem:[#allocation5 + $0x24] sm:$0xf]
    %v117 = vld [vmem:[#allocation5 + $0x28] sm:$0xf]
    %v118 = vld [vmem:[#allocation5 + $0x2c] sm:$0xf]
    %v119 = vld [vmem:[#allocation5 + $0x30] sm:$0xf]
    %v120 = vld [vmem:[#allocation5 + $0x34] sm:$0xf]
    %v121 = vld [vmem:[#allocation5 + $0x38] sm:$0xf]
    %v122 = vld [vmem:[#allocation5 + $0x3c] sm:$0xf]
    %v123 = vld [vmem:[%s2] sm:$0x1]
    %v125 = vlaneseq
    %v126 = vshrl.u32 %v125, 7
    %v127 = vsub.s32 0, %v126
    %v128 = vrot.slane %v123, %v127
    %v146 = vunpack.c.l.b16 %v107
    %v147 = vunpack.c.l.b16 %v108
    %v148 = vunpack.c.l.b16 %v109
    %v149 = vunpack.c.l.b16 %v110
    %v150 = vunpack.c.l.b16 %v111
    %v151 = vunpack.c.l.b16 %v112
    %v152 = vunpack.c.l.b16 %v113
    %v153 = vunpack.c.l.b16 %v114
    %v154 = vunpack.c.l.b16 %v115
    %v155 = vunpack.c.l.b16 %v116
    %v156 = vunpack.c.l.b16 %v117
    %v157 = vunpack.c.l.b16 %v118
    %v158 = vunpack.c.l.b16 %v119
    %v159 = vunpack.c.l.b16 %v120
    %v160 = vunpack.c.l.b16 %v121
    %v161 = vunpack.c.l.b16 %v122
    %v162 = vpack.c.b16 %v147, %v146
    %v163 = vpack.c.b16 %v149, %v148
    %v164 = vpack.c.b16 %v151, %v150
    %v165 = vpack.c.b16 %v153, %v152
    %v166 = vpack.c.b16 %v155, %v154
    %v167 = vpack.c.b16 %v157, %v156
    %v168 = vpack.c.b16 %v159, %v158
    %v169 = vpack.c.b16 %v161, %v160
    %178 = vmatprep.subr.bf16.mxu0 0
    %179 = vmatpush1.bf16.msra.mxu0 %v162
    %180 = vmatprep.subr.bf16.mxu0 0
    %181 = vmatpush1.bf16.msra.mxu0 %v163
    %182 = vmatprep.subr.bf16.mxu0 0
    %183 = vmatpush1.bf16.msra.mxu0 %v164
    %184 = vmatprep.subr.bf16.mxu0 0
    %185 = vmatpush1.bf16.msra.mxu0 %v165
    %186 = vmatprep.subr.bf16.mxu0 0
    %187 = vmatpush1.bf16.msra.mxu0 %v166
    %188 = vmatprep.subr.bf16.mxu0 0
    %189 = vmatpush1.bf16.msra.mxu0 %v167
    %190 = vmatprep.subr.bf16.mxu0 0
    %191 = vmatpush1.bf16.msra.mxu0 %v168
    %192 = vmatprep.subr.bf16.mxu0 0
    %193 = vmatpush1.bf16.msra.mxu0 %v169
    %194 = vmatprep.subr.bf16.mxu0 0
    %195 = vmatpush1.bf16.msra.mxu0 0
    %196 = vmatprep.subr.bf16.mxu0 0
    %197 = vmatpush1.bf16.msra.mxu0 0
    %198 = vmatprep.subr.bf16.mxu0 0
    %199 = vmatpush1.bf16.msra.mxu0 0
    %200 = vmatprep.subr.bf16.mxu0 0
    %201 = vmatpush1.bf16.msra.mxu0 0
    %202 = vmatprep.subr.bf16.mxu0 0
    %203 = vmatpush1.bf16.msra.mxu0 0
    %204 = vmatprep.subr.bf16.mxu0 0
    %205 = vmatpush1.bf16.msra.mxu0 0
    %206 = vmatprep.subr.bf16.mxu0 0
    %207 = vmatpush1.bf16.msra.mxu0 0
    %208 = vmatprep.subr.bf16.mxu0 0
    %209 = vmatpush1.bf16.msra.mxu0 0
    %210 = vmatprep.mubr.bf16.mxu0 0
    %211 = vmatmul.mubr.bf16.gmra.mrb[0].mxu0 %v99
    %v212 = vpop.f32.mrb[0].mxu0
    %v213 = vadd.f32 %v128, %v212
    %v214 = vpop.f32.mrb[0].mxu0
    %v215 = vpop.f32.mrb[0].mxu0
    %v216 = vadd.f32 %v128, %v215
    %v217 = vpop.f32.mrb[0].mxu0
    %218 = vmatprep.mubr.bf16.mxu0 0
    %219 = vmatmul.mubr.bf16.gmra.mrb[0].mxu0 %v100
    %v220 = vpop.f32.mrb[0].mxu0
    %v221 = vadd.f32 %v128, %v220
    %v222 = vpop.f32.mrb[0].mxu0
    %v223 = vpop.f32.mrb[0].mxu0
    %v224 = vadd.f32 %v128, %v223
    %v225 = vpop.f32.mrb[0].mxu0
    %226 = vmatprep.mubr.bf16.mxu0 0
    %227 = vmatmul.mubr.bf16.gmra.mrb[0].mxu0 %v101
    %v228 = vpop.f32.mrb[0].mxu0
    %v229 = vadd.f32 %v128, %v228
    %v230 = vpop.f32.mrb[0].mxu0
    %v231 = vpop.f32.mrb[0].mxu0
    %v232 = vadd.f32 %v128, %v231
    %v233 = vpop.f32.mrb[0].mxu0
    %234 = vmatprep.mubr.bf16.mxu0 0
    %235 = vmatmul.mubr.bf16.gmra.mrb[0].mxu0 %v102
    %v236 = vpop.f32.mrb[0].mxu0
    %v237 = vadd.f32 %v128, %v236
    %v238 = vpop.f32.mrb[0].mxu0
    %v239 = vpop.f32.mrb[0].mxu0
    %v240 = vadd.f32 %v128, %v239
    %v241 = vpop.f32.mrb[0].mxu0
    %242 = vmatprep.mubr.bf16.mxu0 0
    %243 = vmatmul.mubr.bf16.gmra.mrb[0].mxu0 %v103
    %v244 = vpop.f32.mrb[0].mxu0
    %v245 = vadd.f32 %v128, %v244
    %v246 = vpop.f32.mrb[0].mxu0
    %v247 = vpop.f32.mrb[0].mxu0
    %v248 = vadd.f32 %v128, %v247
    %v249 = vpop.f32.mrb[0].mxu0
    %250 = vmatprep.mubr.bf16.mxu0 0
    %251 = vmatmul.mubr.bf16.gmra.mrb[0].mxu0 %v104
    %v252 = vpop.f32.mrb[0].mxu0
    %v253 = vadd.f32 %v128, %v252
    %v254 = vpop.f32.mrb[0].mxu0
    %v255 = vpop.f32.mrb[0].mxu0
    %v256 = vadd.f32 %v128, %v255
    %v257 = vpop.f32.mrb[0].mxu0
    %258 = vmatprep.mubr.bf16.mxu0 0
    %259 = vmatmul.mubr.bf16.gmra.mrb[0].mxu0 %v105
    %v260 = vpop.f32.mrb[0].mxu0
    %v261 = vadd.f32 %v128, %v260
    %v262 = vpop.f32.mrb[0].mxu0
    %v263 = vpop.f32.mrb[0].mxu0
    %v264 = vadd.f32 %v128, %v263
    %v265 = vpop.f32.mrb[0].mxu0
    %266 = vmatprep.mubr.bf16.mxu0 0
    %267 = vmatmul.mubr.bf16.gmra.mrb[0].mxu0 %v106
    %v268 = vpop.f32.mrb[0].mxu0
    %v269 = vadd.f32 %v128, %v268
    %v270 = vpop.f32.mrb[0].mxu0
    %v271 = vpop.f32.mrb[0].mxu0
    %v272 = vadd.f32 %v128, %v271
    %v273 = vpop.f32.mrb[0].mxu0
    %274 = vdwg.mxu0
    %v275 = vmax.f32 %v213, 0.0
    %v276 = vmax.f32 %v216, 0.0
    %v277 = vmax.f32 %v221, 0.0
    %v278 = vmax.f32 %v224, 0.0
    %v279 = vmax.f32 %v229, 0.0
    %v280 = vmax.f32 %v232, 0.0
    %v281 = vmax.f32 %v237, 0.0
    %v282 = vmax.f32 %v240, 0.0
    %v283 = vmax.f32 %v245, 0.0
    %v284 = vmax.f32 %v248, 0.0
    %v285 = vmax.f32 %v253, 0.0
    %v286 = vmax.f32 %v256, 0.0
    %v287 = vmax.f32 %v261, 0.0
    %v288 = vmax.f32 %v264, 0.0
    %v289 = vmax.f32 %v269, 0.0
    %v290 = vmax.f32 %v272, 0.0
    %v291 = vpack.c.bf16 %v276, %v275
    %v292 = vpack.c.bf16 %v278, %v277
    %v293 = vpack.c.bf16 %v280, %v279
    %v294 = vpack.c.bf16 %v282, %v281
    %v295 = vpack.c.bf16 %v284, %v283
    %v296 = vpack.c.bf16 %v286, %v285
    %v297 = vpack.c.bf16 %v288, %v287
    %v298 = vpack.c.bf16 %v290, %v289
    %v299 = vld [vmem:[#allocation7] sm:$0xf]
    %v300 = vld [vmem:[#allocation7 + $0x4] sm:$0xf]
    %v301 = vld [vmem:[#allocation7 + $0x8] sm:$0xf]
    %v302 = vld [vmem:[#allocation7 + $0xc] sm:$0xf]
    %v303 = vld [vmem:[#allocation7 + $0x10] sm:$0xf]
    %v304 = vld [vmem:[#allocation7 + $0x14] sm:$0xf]
    %v305 = vld [vmem:[#allocation7 + $0x18] sm:$0xf]
    %v306 = vld [vmem:[#allocation7 + $0x1c] sm:$0xf]
    %v307 = vld [vmem:[#allocation7 + $0x20] sm:$0xf]
    %v308 = vld [vmem:[#allocation7 + $0x24] sm:$0xf]
    %v309 = vld [vmem:[#allocation7 + $0x28] sm:$0xf]
    %v310 = vld [vmem:[#allocation7 + $0x2c] sm:$0xf]
    %v311 = vld [vmem:[#allocation7 + $0x30] sm:$0xf]
    %v312 = vld [vmem:[#allocation7 + $0x34] sm:$0xf]
    %v313 = vld [vmem:[#allocation7 + $0x38] sm:$0xf]
    %v314 = vld [vmem:[#allocation7 + $0x3c] sm:$0xf]
    %v315 = vld [vmem:[%s4] sm:$0x1]
    %v317 = vlaneseq
    %v318 = vshrl.u32 %v317, 7
    %v319 = vsub.s32 0, %v318
    %v320 = vrot.slane %v315, %v319
    %v338 = vunpack.c.l.b16 %v299
    %v339 = vunpack.c.l.b16 %v300
    %v340 = vunpack.c.l.b16 %v301
    %v341 = vunpack.c.l.b16 %v302
    %v342 = vunpack.c.l.b16 %v303
    %v343 = vunpack.c.l.b16 %v304
    %v344 = vunpack.c.l.b16 %v305
    %v345 = vunpack.c.l.b16 %v306
    %v346 = vunpack.c.l.b16 %v307
    %v347 = vunpack.c.l.b16 %v308
    %v348 = vunpack.c.l.b16 %v309
    %v349 = vunpack.c.l.b16 %v310
    %v350 = vunpack.c.l.b16 %v311
    %v351 = vunpack.c.l.b16 %v312
    %v352 = vunpack.c.l.b16 %v313
    %v353 = vunpack.c.l.b16 %v314
    %v354 = vpack.c.b16 %v339, %v338
    %v355 = vpack.c.b16 %v341, %v340
    %v356 = vpack.c.b16 %v343, %v342
    %v357 = vpack.c.b16 %v345, %v344
    %v358 = vpack.c.b16 %v347, %v346
    %v359 = vpack.c.b16 %v349, %v348
    %v360 = vpack.c.b16 %v351, %v350
    %v361 = vpack.c.b16 %v353, %v352
    %370 = vmatprep.subr.bf16.mxu0 0
    %371 = vmatpush1.bf16.msra.mxu0 %v354
    %372 = vmatprep.subr.bf16.mxu0 0
    %373 = vmatpush1.bf16.msra.mxu0 %v355
    %374 = vmatprep.subr.bf16.mxu0 0
    %375 = vmatpush1.bf16.msra.mxu0 %v356
    %376 = vmatprep.subr.bf16.mxu0 0
    %377 = vmatpush1.bf16.msra.mxu0 %v357
    %378 = vmatprep.subr.bf16.mxu0 0
    %379 = vmatpush1.bf16.msra.mxu0 %v358
    %380 = vmatprep.subr.bf16.mxu0 0
    %381 = vmatpush1.bf16.msra.mxu0 %v359
    %382 = vmatprep.subr.bf16.mxu0 0
    %383 = vmatpush1.bf16.msra.mxu0 %v360
    %384 = vmatprep.subr.bf16.mxu0 0
    %385 = vmatpush1.bf16.msra.mxu0 %v361
    %386 = vmatprep.subr.bf16.mxu0 0
    %387 = vmatpush1.bf16.msra.mxu0 0
    %388 = vmatprep.subr.bf16.mxu0 0
    %389 = vmatpush1.bf16.msra.mxu0 0
    %390 = vmatprep.subr.bf16.mxu0 0
    %391 = vmatpush1.bf16.msra.mxu0 0
    %392 = vmatprep.subr.bf16.mxu0 0
    %393 = vmatpush1.bf16.msra.mxu0 0
    %394 = vmatprep.subr.bf16.mxu0 0
    %395 = vmatpush1.bf16.msra.mxu0 0
    %396 = vmatprep.subr.bf16.mxu0 0
    %397 = vmatpush1.bf16.msra.mxu0 0
    %398 = vmatprep.subr.bf16.mxu0 0
    %399 = vmatpush1.bf16.msra.mxu0 0
    %400 = vmatprep.subr.bf16.mxu0 0
    %401 = vmatpush1.bf16.msra.mxu0 0
    %402 = vmatprep.mubr.bf16.mxu0 0
    %403 = vmatmul.mubr.bf16.gmra.mrb[0].mxu0 %v291
    %v404 = vpop.f32.mrb[0].mxu0
    %v405 = vadd.f32 %v320, %v404
    %v406 = vpop.f32.mrb[0].mxu0
    %v407 = vpop.f32.mrb[0].mxu0
    %v408 = vadd.f32 %v320, %v407
    %v409 = vpop.f32.mrb[0].mxu0
    %410 = vmatprep.mubr.bf16.mxu0 0
    %411 = vmatmul.mubr.bf16.gmra.mrb[0].mxu0 %v292
    %v412 = vpop.f32.mrb[0].mxu0
    %v413 = vadd.f32 %v320, %v412
    %v414 = vpop.f32.mrb[0].mxu0
    %v415 = vpop.f32.mrb[0].mxu0
    %v416 = vadd.f32 %v320, %v415
    %v417 = vpop.f32.mrb[0].mxu0
    %418 = vmatprep.mubr.bf16.mxu0 0
    %419 = vmatmul.mubr.bf16.gmra.mrb[0].mxu0 %v293
    %v420 = vpop.f32.mrb[0].mxu0
    %v421 = vadd.f32 %v320, %v420
    %v422 = vpop.f32.mrb[0].mxu0
    %v423 = vpop.f32.mrb[0].mxu0
    %v424 = vadd.f32 %v320, %v423
    %v425 = vpop.f32.mrb[0].mxu0
    %426 = vmatprep.mubr.bf16.mxu0 0
    %427 = vmatmul.mubr.bf16.gmra.mrb[0].mxu0 %v294
    %v428 = vpop.f32.mrb[0].mxu0
    %v429 = vadd.f32 %v320, %v428
    %v430 = vpop.f32.mrb[0].mxu0
    %v431 = vpop.f32.mrb[0].mxu0
    %v432 = vadd.f32 %v320, %v431
    %v433 = vpop.f32.mrb[0].mxu0
    %434 = vmatprep.mubr.bf16.mxu0 0
    %435 = vmatmul.mubr.bf16.gmra.mrb[0].mxu0 %v295
    %v436 = vpop.f32.mrb[0].mxu0
    %v437 = vadd.f32 %v320, %v436
    %v438 = vpop.f32.mrb[0].mxu0
    %v439 = vpop.f32.mrb[0].mxu0
    %v440 = vadd.f32 %v320, %v439
    %v441 = vpop.f32.mrb[0].mxu0
    %442 = vmatprep.mubr.bf16.mxu0 0
    %443 = vmatmul.mubr.bf16.gmra.mrb[0].mxu0 %v296
    %v444 = vpop.f32.mrb[0].mxu0
    %v445 = vadd.f32 %v320, %v444
    %v446 = vpop.f32.mrb[0].mxu0
    %v447 = vpop.f32.mrb[0].mxu0
    %v448 = vadd.f32 %v320, %v447
    %v449 = vpop.f32.mrb[0].mxu0
    %450 = vmatprep.mubr.bf16.mxu0 0
    %451 = vmatmul.mubr.bf16.gmra.mrb[0].mxu0 %v297
    %v452 = vpop.f32.mrb[0].mxu0
    %v453 = vadd.f32 %v320, %v452
    %v454 = vpop.f32.mrb[0].mxu0
    %v455 = vpop.f32.mrb[0].mxu0
    %v456 = vadd.f32 %v320, %v455
    %v457 = vpop.f32.mrb[0].mxu0
    %458 = vmatprep.mubr.bf16.mxu0 0
    %459 = vmatmul.mubr.bf16.gmra.mrb[0].mxu0 %v298
    %v460 = vpop.f32.mrb[0].mxu0
    %v461 = vadd.f32 %v320, %v460
    %v462 = vpop.f32.mrb[0].mxu0
    %v463 = vpop.f32.mrb[0].mxu0
    %v464 = vadd.f32 %v320, %v463
    %v465 = vpop.f32.mrb[0].mxu0
    %466 = vdwg.mxu0
    %v467 = vmax.f32 %v405, 0.0
    %v468 = vmax.f32 %v408, 0.0
    %v469 = vmax.f32 %v413, 0.0
    %v470 = vmax.f32 %v416, 0.0
    %v471 = vmax.f32 %v421, 0.0
    %v472 = vmax.f32 %v424, 0.0
    %v473 = vmax.f32 %v429, 0.0
    %v474 = vmax.f32 %v432, 0.0
    %v475 = vmax.f32 %v437, 0.0
    %v476 = vmax.f32 %v440, 0.0
    %v477 = vmax.f32 %v445, 0.0
    %v478 = vmax.f32 %v448, 0.0
    %v479 = vmax.f32 %v453, 0.0
    %v480 = vmax.f32 %v456, 0.0
    %v481 = vmax.f32 %v461, 0.0
    %v482 = vmax.f32 %v464, 0.0
    %v483 = vpack.c.bf16 %v468, %v467
    %v484 = vpack.c.bf16 %v470, %v469
    %v485 = vpack.c.bf16 %v472, %v471
    %v486 = vpack.c.bf16 %v474, %v473
    %v487 = vpack.c.bf16 %v476, %v475
    %v488 = vpack.c.bf16 %v478, %v477
    %v489 = vpack.c.bf16 %v480, %v479
    %v490 = vpack.c.bf16 %v482, %v481
    %v491 = vld [vmem:[#allocation8] sm:$0xf]
    %v492 = vld [vmem:[#allocation8 + $0x4] sm:$0xf]
    %v493 = vld [vmem:[#allocation8 + $0x8] sm:$0xf]
    %v494 = vld [vmem:[#allocation8 + $0xc] sm:$0xf]
    %v495 = vld [vmem:[#allocation8 + $0x10] sm:$0xf]
    %v496 = vld [vmem:[#allocation8 + $0x14] sm:$0xf]
    %v497 = vld [vmem:[#allocation8 + $0x18] sm:$0xf]
    %v498 = vld [vmem:[#allocation8 + $0x1c] sm:$0xf]
    %v499 = vld [vmem:[#allocation8 + $0x20] sm:$0xf]
    %v500 = vld [vmem:[#allocation8 + $0x24] sm:$0xf]
    %v501 = vld [vmem:[#allocation8 + $0x28] sm:$0xf]
    %v502 = vld [vmem:[#allocation8 + $0x2c] sm:$0xf]
    %v503 = vld [vmem:[#allocation8 + $0x30] sm:$0xf]
    %v504 = vld [vmem:[#allocation8 + $0x34] sm:$0xf]
    %v505 = vld [vmem:[#allocation8 + $0x38] sm:$0xf]
    %v506 = vld [vmem:[#allocation8 + $0x3c] sm:$0xf]
    %v507 = vld [vmem:[%s6] sm:$0x1]
    %v509 = vlaneseq
    %v510 = vshrl.u32 %v509, 7
    %v511 = vsub.s32 0, %v510
    %v512 = vrot.slane %v507, %v511
    %v530 = vunpack.c.l.b16 %v491
    %v531 = vunpack.c.l.b16 %v492
    %v532 = vunpack.c.l.b16 %v493
    %v533 = vunpack.c.l.b16 %v494
    %v534 = vunpack.c.l.b16 %v495
    %v535 = vunpack.c.l.b16 %v496
    %v536 = vunpack.c.l.b16 %v497
    %v537 = vunpack.c.l.b16 %v498
    %v538 = vunpack.c.l.b16 %v499
    %v539 = vunpack.c.l.b16 %v500
    %v540 = vunpack.c.l.b16 %v501
    %v541 = vunpack.c.l.b16 %v502
    %v542 = vunpack.c.l.b16 %v503
    %v543 = vunpack.c.l.b16 %v504
    %v544 = vunpack.c.l.b16 %v505
    %v545 = vunpack.c.l.b16 %v506
    %v546 = vpack.c.b16 %v531, %v530
    %v547 = vpack.c.b16 %v533, %v532
    %v548 = vpack.c.b16 %v535, %v534
    %v549 = vpack.c.b16 %v537, %v536
    %v550 = vpack.c.b16 %v539, %v538
    %v551 = vpack.c.b16 %v541, %v540
    %v552 = vpack.c.b16 %v543, %v542
    %v553 = vpack.c.b16 %v545, %v544
    %562 = vmatprep.subr.bf16.mxu0 0
    %563 = vmatpush1.bf16.msra.mxu0 %v546
    %564 = vmatprep.subr.bf16.mxu0 0
    %565 = vmatpush1.bf16.msra.mxu0 %v547
    %566 = vmatprep.subr.bf16.mxu0 0
    %567 = vmatpush1.bf16.msra.mxu0 %v548
    %568 = vmatprep.subr.bf16.mxu0 0
    %569 = vmatpush1.bf16.msra.mxu0 %v549
    %570 = vmatprep.subr.bf16.mxu0 0
    %571 = vmatpush1.bf16.msra.mxu0 %v550
    %572 = vmatprep.subr.bf16.mxu0 0
    %573 = vmatpush1.bf16.msra.mxu0 %v551
    %574 = vmatprep.subr.bf16.mxu0 0
    %575 = vmatpush1.bf16.msra.mxu0 %v552
    %576 = vmatprep.subr.bf16.mxu0 0
    %577 = vmatpush1.bf16.msra.mxu0 %v553
    %578 = vmatprep.subr.bf16.mxu0 0
    %579 = vmatpush1.bf16.msra.mxu0 0
    %580 = vmatprep.subr.bf16.mxu0 0
    %581 = vmatpush1.bf16.msra.mxu0 0
    %582 = vmatprep.subr.bf16.mxu0 0
    %583 = vmatpush1.bf16.msra.mxu0 0
    %584 = vmatprep.subr.bf16.mxu0 0
    %585 = vmatpush1.bf16.msra.mxu0 0
    %586 = vmatprep.subr.bf16.mxu0 0
    %587 = vmatpush1.bf16.msra.mxu0 0
    %588 = vmatprep.subr.bf16.mxu0 0
    %589 = vmatpush1.bf16.msra.mxu0 0
    %590 = vmatprep.subr.bf16.mxu0 0
    %591 = vmatpush1.bf16.msra.mxu0 0
    %592 = vmatprep.subr.bf16.mxu0 0
    %593 = vmatpush1.bf16.msra.mxu0 0
    %594 = vmatprep.mubr.bf16.mxu0 0
    %595 = vmatmul.mubr.bf16.gmra.mrb[0].mxu0 %v483
    %v596 = vpop.f32.mrb[0].mxu0
    %v597 = vadd.f32 %v512, %v596
    %v598 = vpop.f32.mrb[0].mxu0
    %v599 = vpop.f32.mrb[0].mxu0
    %v600 = vadd.f32 %v512, %v599
    %v601 = vpop.f32.mrb[0].mxu0
    %602 = vmatprep.mubr.bf16.mxu0 0
    %603 = vmatmul.mubr.bf16.gmra.mrb[0].mxu0 %v484
    %v604 = vpop.f32.mrb[0].mxu0
    %v605 = vadd.f32 %v512, %v604
    %v606 = vpop.f32.mrb[0].mxu0
    %v607 = vpop.f32.mrb[0].mxu0
    %v608 = vadd.f32 %v512, %v607
    %v609 = vpop.f32.mrb[0].mxu0
    %610 = vmatprep.mubr.bf16.mxu0 0
    %611 = vmatmul.mubr.bf16.gmra.mrb[0].mxu0 %v485
    %v612 = vpop.f32.mrb[0].mxu0
    %v613 = vadd.f32 %v512, %v612
    %v614 = vpop.f32.mrb[0].mxu0
    %v615 = vpop.f32.mrb[0].mxu0
    %v616 = vadd.f32 %v512, %v615
    %v617 = vpop.f32.mrb[0].mxu0
    %618 = vmatprep.mubr.bf16.mxu0 0
    %619 = vmatmul.mubr.bf16.gmra.mrb[0].mxu0 %v486
    %v620 = vpop.f32.mrb[0].mxu0
    %v621 = vadd.f32 %v512, %v620
    %v622 = vpop.f32.mrb[0].mxu0
    %v623 = vpop.f32.mrb[0].mxu0
    %v624 = vadd.f32 %v512, %v623
    %v625 = vpop.f32.mrb[0].mxu0
    %626 = vmatprep.mubr.bf16.mxu0 0
    %627 = vmatmul.mubr.bf16.gmra.mrb[0].mxu0 %v487
    %v628 = vpop.f32.mrb[0].mxu0
    %v629 = vadd.f32 %v512, %v628
    %v630 = vpop.f32.mrb[0].mxu0
    %v631 = vpop.f32.mrb[0].mxu0
    %v632 = vadd.f32 %v512, %v631
    %v633 = vpop.f32.mrb[0].mxu0
    %634 = vmatprep.mubr.bf16.mxu0 0
    %635 = vmatmul.mubr.bf16.gmra.mrb[0].mxu0 %v488
    %v636 = vpop.f32.mrb[0].mxu0
    %v637 = vadd.f32 %v512, %v636
    %v638 = vpop.f32.mrb[0].mxu0
    %v639 = vpop.f32.mrb[0].mxu0
    %v640 = vadd.f32 %v512, %v639
    %v641 = vpop.f32.mrb[0].mxu0
    %642 = vmatprep.mubr.bf16.mxu0 0
    %643 = vmatmul.mubr.bf16.gmra.mrb[0].mxu0 %v489
    %v644 = vpop.f32.mrb[0].mxu0
    %v645 = vadd.f32 %v512, %v644
    %v646 = vpop.f32.mrb[0].mxu0
    %v647 = vpop.f32.mrb[0].mxu0
    %v648 = vadd.f32 %v512, %v647
    %v649 = vpop.f32.mrb[0].mxu0
    %650 = vmatprep.mubr.bf16.mxu0 0
    %651 = vmatmul.mubr.bf16.gmra.mrb[0].mxu0 %v490
    %v652 = vpop.f32.mrb[0].mxu0
    %v653 = vadd.f32 %v512, %v652
    %v654 = vpop.f32.mrb[0].mxu0
    %v655 = vpop.f32.mrb[0].mxu0
    %v656 = vadd.f32 %v512, %v655
    %v657 = vpop.f32.mrb[0].mxu0
    %658 = vdwg.mxu0
    %659 = vst [vmem:[#allocation10] sm:$0xff] %v597
    %660 = vst [vmem:[#allocation10 + $0x8] sm:$0xff] %v600
    %661 = vst [vmem:[#allocation10 + $0x10] sm:$0xff] %v605
    %662 = vst [vmem:[#allocation10 + $0x18] sm:$0xff] %v608
    %663 = vst [vmem:[#allocation10 + $0x20] sm:$0xff] %v613
    %664 = vst [vmem:[#allocation10 + $0x28] sm:$0xff] %v616
    %665 = vst [vmem:[#allocation10 + $0x30] sm:$0xff] %v621
    %666 = vst [vmem:[#allocation10 + $0x38] sm:$0xff] %v624
    %667 = vst [vmem:[#allocation10 + $0x40] sm:$0xff] %v629
    %668 = vst [vmem:[#allocation10 + $0x48] sm:$0xff] %v632
    %669 = vst [vmem:[#allocation10 + $0x50] sm:$0xff] %v637
    %670 = vst [vmem:[#allocation10 + $0x58] sm:$0xff] %v640
    %671 = vst [vmem:[#allocation10 + $0x60] sm:$0xff] %v645
    %672 = vst [vmem:[#allocation10 + $0x68] sm:$0xff] %v648
    %673 = vst [vmem:[#allocation10 + $0x70] sm:$0xff] %v653
    %674 = vst [vmem:[#allocation10 + $0x78] sm:$0xff] %v656
    // Predicated region
    $region46: #{tpu_custom_call.1} parent=1 // pred_check
      _
    $region47: #{tpu_custom_call.1} parent=1 // pred_check_branch
      %676 = sbr.rel (0) target = $region49
    $region48: #{tpu_custom_call.1} parent=1 // pred_region
      %s678 = ssub.s32 2048, 2048
      %679 = vsyncadd [#allocation4], %s678
      %s680 = sshll.u32 [#allocation10], 4
      %s681 = int_to_ptr.vmem [resolvable:$true] %s680
      %686 = dma.vmem_to_hbm [thread:$0]  %s681, 2048, %s7, [#allocation4], 128, 128, 8
    $region49: #{tpu_custom_call.1} parent=1 // pred_fallthru
      _
    // Predicated region
    $region50: #{tpu_custom_call.1} parent=1 // pred_check
      _
    $region51: #{tpu_custom_call.1} parent=1 // pred_check_branch
      %688 = sbr.rel (0) target = $region53
    $region52: #{tpu_custom_call.1} parent=1 // pred_region
      %689 = dma.done [#allocation4], 2048
    $region53: #{tpu_custom_call.1} parent=1 // pred_fallthru
      _
    %690 = vsyncpa [#allocation3], 1
    %691 = vsyncpa [#allocation6], 1
    %692 = vsyncpa [#allocation9], 1
    %693 = vsyncpa [#allocation4], 1

</llo_original>
